<compile_context>
chip_gen: v5e
topology: v5e:2x2
jax: 0.10.0
libtpu: 0.0.40
codegen_flags: <defaults>
</compile_context>

<pallas_src>
import jax
import jax.numpy as jnp
from jax.experimental import pallas as pl
from jax.experimental.pallas import tpu as pltpu


def _channel_rate_kernel(x_ref, r_ref, o_ref):
    # x_ref: (TR, TH) activation tile; r_ref: (TR, 1) per-row rate; o_ref: (TR, TH).
    # Single VPU broadcast-multiply (promoted to the output dtype); the kernel
    # is purely HBM-bandwidth bound.
    o_ref[...] = x_ref[...].astype(o_ref.dtype) * r_ref[...]


def _round_up(a: int, b: int) -> int:
    return ((a + b - 1) // b) * b


_SUBLANE = {4: 8, 2: 16, 1: 32}   # rows per vreg sublane group by itemsize


def channel_rate_inverse(x: jax.Array, rates: jax.Array) -> jax.Array:
    """x: (N, C, H, W), rates: (C,). Returns x * rates[None, :, None, None]."""
    N, C, H, W = x.shape
    assert rates.shape == (C,)

    out_dtype = jnp.result_type(x.dtype, rates.dtype)
    rows, hw = N * C, H * W
    x_item = jnp.dtype(x.dtype).itemsize
    o_item = jnp.dtype(out_dtype).itemsize

    # ---- small-tensor fast path: launch/wrapper overhead dominates ----
    if rows * hw * max(x_item, o_item) < 256 * 1024:
        return x.astype(out_dtype) * rates.astype(out_dtype).reshape(-1, 1, 1)

    # Strictest sublane packing required by either the input or output dtype.
    sublane = max(_SUBLANE.get(x_item, 8), _SUBLANE.get(o_item, 8))

    # ---- lane (HW) tile: lane-dense multiple of 128, capped for VMEM ----
    MAX_TH = 4096
    th = min(_round_up(hw, 128), MAX_TH)

    # ---- row tile: x block + out block ~= 8 MiB (=> ~16 MiB double-buffered) ----
    target_pair_bytes = 8 * 1024 * 1024
    tr = (target_pair_bytes // (th * (x_item + o_item))) // sublane * sublane
    tr = max(sublane, tr)
    tr = min(tr, _round_up(rows, sublane))

    # cdiv grid with ragged boundary tiles: no wrapper-side pad / slice,
    # no extra HBM traffic; only edge tiles pay masked stores.
    grid = (pl.cdiv(rows, tr), pl.cdiv(hw, th))       # HW innermost

    x2d = x.reshape(rows, hw)
    # Row r of x2d scales by rates[r % C]; build the per-row rate column in the
    # promoted dtype (matches PyTorch type promotion for mixed precision).
    r2d = jnp.tile(rates.astype(out_dtype), (N,)).reshape(rows, 1)

    out2d = pl.pallas_call(
        _channel_rate_kernel,
        out_shape=jax.ShapeDtypeStruct((rows, hw), out_dtype),
        grid_spec=pltpu.PrefetchScalarGridSpec(
            num_scalar_prefetch=0,
            grid=grid,
            in_specs=[
                pl.BlockSpec((tr, th), lambda i, j: (i, j)),
                # Independent of the inner (HW) axis -> the tiny rate block
                # stays resident across inner steps, never re-DMA'd.
                pl.BlockSpec((tr, 1), lambda i, j: (i, 0)),
            ],
            out_specs=pl.BlockSpec((tr, th), lambda i, j: (i, j)),
        ),
        compiler_params=pltpu.CompilerParams(
            # No reduction axis -> both axes fully parallel so the grid can
            # shard across v7x's two TensorCores; neutral on v5e/v6e.
            dimension_semantics=("parallel", "parallel"),
            # Explicit scoped-VMEM limit: ~16 MiB of double-buffered blocks
            # compiles on v5e (16 MiB default) and leaves headroom under
            # v7x's 64 MiB physical VMEM.
            vmem_limit_bytes=32 * 1024 * 1024,
        ),
    )(x2d, r2d)

    return out2d.reshape(N, C, H, W)


if __name__ == "__main__":
    key = jax.random.PRNGKey(0)
    kx1, kr1, kx2, kr2 = jax.random.split(key, 4)

    # --- spec-sized small input (takes the fused-XLA fast path) ---
    N, C, H, W = 2, 4, 16, 16
    x_small = jax.random.normal(kx1, (N, C, H, W), dtype=jnp.float32)
    rates_small = jax.random.uniform(kr1, (C,), dtype=jnp.float32,
                                     minval=0.5, maxval=2.0)
    out_small = jax.block_until_ready(channel_rate_inverse(x_small, rates_small))
    ref_small = x_small * rates_small.reshape(-1, 1, 1)
    assert out_small.shape == x_small.shape
    assert jnp.allclose(out_small, ref_small, atol=1e-6, rtol=1e-6)

    # --- larger, deliberately ragged shape -> exercises the Pallas kernel with
    #     masked boundary tiles on both the row (35 % 8 != 0) and lane
    #     (5184 % 128 != 0) axes ---
    N2, C2, H2, W2 = 5, 7, 72, 72
    x_big = jax.random.normal(kx2, (N2, C2, H2, W2), dtype=jnp.float32)
    rates_big = jax.random.uniform(kr2, (C2,), dtype=jnp.float32,
                                   minval=0.5, maxval=2.0)
    out_big = jax.block_until_ready(channel_rate_inverse(x_big, rates_big))
    ref_big = x_big * rates_big.reshape(-1, 1, 1)
    assert out_big.shape == x_big.shape
    assert jnp.allclose(out_big, ref_big, atol=1e-6, rtol=1e-6)

    print("KERNEL_OK")
</pallas_src>

<mosaic_0001>
module attributes {stable_mosaic.version = 11 : i64} {
  func.func @_channel_rate_kernel(%arg0: i32, %arg1: i32, %arg2: memref<40x4096xf32, #tpu.memory_space<vmem>>, %arg3: memref<40x1xf32, #tpu.memory_space<vmem>>, %arg4: memref<40x4096xf32, #tpu.memory_space<vmem>>) attributes {dimension_semantics = [#tpu.dimension_semantics<parallel>, #tpu.dimension_semantics<parallel>], iteration_bounds = array<i64: 1, 2>, scalar_prefetch = 0 : i64, scratch_operands = 0 : i64, tpu.core_type = #tpu.core_type<tc>, window_params = [{transform_indices = @transform_0, window_bounds = array<i64: 40, 4096>}, {transform_indices = @transform_1, window_bounds = array<i64: 40, 1>}, {transform_indices = @transform_2, window_bounds = array<i64: 40, 4096>}]} {
    %c0 = arith.constant 0 : index
    %c0_0 = arith.constant 0 : index
    %0 = vector.load %arg2[%c0, %c0_0] : memref<40x4096xf32, #tpu.memory_space<vmem>>, vector<40x4096xf32>
    %c0_1 = arith.constant 0 : index
    %c0_2 = arith.constant 0 : index
    %1 = vector.load %arg3[%c0_1, %c0_2] : memref<40x1xf32, #tpu.memory_space<vmem>>, vector<40x1xf32>
    %2 = vector.broadcast %1 : vector<40x1xf32> to vector<40x4096xf32>
    %3 = arith.mulf %0, %2 : vector<40x4096xf32>
    %c0_3 = arith.constant 0 : index
    %c0_4 = arith.constant 0 : index
    %4 = vector.load %arg4[%c0_3, %c0_4] : memref<40x4096xf32, #tpu.memory_space<vmem>>, vector<40x4096xf32>
    tpu.vector_store %arg4[%c0_3, %c0_4], %3 {strides = array<i32>} : memref<40x4096xf32, #tpu.memory_space<vmem>>, vector<40x4096xf32>,
    return
  }
  func.func @transform_0(%arg0: i32, %arg1: i32) -> (i32, i32) {
    %c0_i32 = arith.constant 0 : i32
    return %arg0, %arg1 : i32, i32
  }
  func.func @transform_1(%arg0: i32, %arg1: i32) -> (i32, i32) {
    %c0_i32 = arith.constant 0 : i32
    %c0_i32_0 = arith.constant 0 : i32
    return %arg0, %c0_i32 : i32, i32
  }
  func.func @transform_2(%arg0: i32, %arg1: i32) -> (i32, i32) {
    %c0_i32 = arith.constant 0 : i32
    return %arg0, %arg1 : i32, i32
  }
}

</mosaic_0001>

<llo_original>
// kernel: tpu_custom_call.1
$region0: #{tpu_custom_call.1}
  #allocation0 [shape = 'u32[]', space=smem, size = 0x4, offset = 0x4, fixed_abs, tag = 'smem constant byte address 0x4 - core index']
  #allocation1 [shape = 'u32[72,128]{1,0:T(1,128)}', space=vmem, size = 0x9000, scoped, tag = 'internal scratch']
  %s0 = inlined_call_operand.hbm [shape: f32[35,5184], index: 0, kind: input, shape index: {}]
  %s1 = inlined_call_operand.vmem [shape: f32[35,1], index: 1, kind: input, shape index: {}]
  %s2 = inlined_call_operand.hbm [shape: f32[35,5184], index: 2, kind: output, shape index: {}]
  %s3 = sld [smem:[#allocation0]]
  $region45: #{tpu_custom_call.1} parent=0
    _
  %s5 = ssub.s32 1, %s3
  %s6 = scalar_select 0, %s5, %s3
  $region1: #{tpu_custom_call.1} parent=0
    #allocation2 [shape = 'u8[1310720]{0}', space=vmem, size = 0x140000, scoped, tag = 'input window, operand 0']
    #allocation3 [shape = 's32[2]{0}', space=sflag, size = 0x8, scoped, tag = 'scoped memory for tpu_custom_call.1']
    #allocation4 [shape = 's32[2]{0}', space=sflag, size = 0x8, scoped, tag = 'scoped memory for tpu_custom_call.1']
    #allocation5 [shape = 'u8[1310720]{0}', space=vmem, size = 0x140000, scoped, tag = 'output window, operand 0']
    %7 = vsyncpa [#allocation3], 0
    %s8 = scalar_lea.sflag [#allocation3], 1
    %9 = vsyncpa %s8, 0
    %10 = vsyncpa [#allocation4], 0
    %s11 = scalar_lea.sflag [#allocation4], 1
    %12 = vsyncpa %s11, 0
    loop: start=0, step=1, limit=4
    $region2: #{tpu_custom_call.1} parent=1 // loop_pre_header
      _
    $region3: #{tpu_custom_call.1} parent=1 // loop_header
      %s14 = sphi 0, %s18
      %p15 = scmp.ge.s32.totalorder %s14, 4
      %s21 = sphi 0, %s33
      %s22 = sphi 0, %s29
      %s23 = sphi 0, %s21
      %s24 = sphi 0, %s22
      %s25 = sphi 0, %s23
      %s26 = sphi 0, %s24
      %s38 = sphi 0, %s40
      %s41 = sphi 0, %s38
      %s42 = sphi 0, %s41
      %s58 = sphi 0, %s42
      %s64 = sphi 0, %s66
      %s67 = sphi 0, %s64
      %s68 = sphi 0, %s67
      %s84 = sphi 0, %s68
      %s92 = sphi 0, %s94
      %s95 = sphi 0, %s92
      %s96 = sphi 0, %s95
      %s112 = sphi 0, %s96
    $region4: #{tpu_custom_call.1} parent=1 // loop_header_branch
      %17 = sbr.rel (%p15) target = $region8
    $region5: #{tpu_custom_call.1} parent=1 // loop_body
      %s19 = ssub.s32 %s14, 1
      %s20 = ssub.s32 %s14, 2
      %s27 = sadd.s32 1, %s22
      %p28 = scmp.ge.s32.totalorder %s27, 2
      %s29 = scalar_select %p28, 0, %s27
      %s30 = sadd.s32 1, %s21
      %s31 = scalar_select %p28, %s30, %s21
      %p32 = scmp.ge.s32.totalorder %s31, 1
      %s33 = scalar_select %p32, 0, %s31
      %s34 = ssub.s32 %s21, %s33
      %s35 = ssub.s32 %s22, %s29
      %s36 = sor.u32 %s34, %s35
      %p37 = scmp.eq.s32.totalorder %s36, 0
      %s39 = sadd.s32 %s38, 1
      %s40 = scalar_select %p37, %s38, %s39
      %p43 = pneg %p37
      %p44 = scmp.eq.s32.totalorder %s14, 1
      %p45 = por %p43, %p44
      %p46 = scmp.ne.s32.totalorder %s38, %s41
      %p47 = scmp.eq.s32.totalorder %s14, 0
      %p48 = por %p46, %p47
      %p49 = scmp.ne.s32.totalorder %s38, %s41
      %p50 = scmp.eq.s32.totalorder %s19, 1
      %p51 = por %p49, %p50
      %p52 = scmp.ne.s32.totalorder %s41, %s42
      %p53 = scmp.eq.s32.totalorder %s19, 0
      %p54 = por %p52, %p53
      %p55 = scmp.ne.s32.totalorder %s41, %s42
      %p56 = scmp.eq.s32.totalorder %s20, 1
      %p57 = por %p55, %p56
      %p59 = scmp.ne.s32.totalorder %s42, %s58
      %p60 = scmp.eq.s32.totalorder %s20, 0
      %p61 = por %p59, %p60
      %s62 = ssub.s32 %s21, %s33
      %p63 = scmp.eq.s32.totalorder %s62, 0
      %s65 = sadd.s32 %s64, 1
      %s66 = scalar_select %p63, %s64, %s65
      %p69 = pneg %p63
      %p70 = scmp.eq.s32.totalorder %s14, 1
      %p71 = por %p69, %p70
      %p72 = scmp.ne.s32.totalorder %s64, %s67
      %p73 = scmp.eq.s32.totalorder %s14, 0
      %p74 = por %p72, %p73
      %p75 = scmp.ne.s32.totalorder %s64, %s67
      %p76 = scmp.eq.s32.totalorder %s19, 1
      %p77 = por %p75, %p76
      %p78 = scmp.ne.s32.totalorder %s67, %s68
      %p79 = scmp.eq.s32.totalorder %s19, 0
      %p80 = por %p78, %p79
      %p81 = scmp.ne.s32.totalorder %s67, %s68
      %p82 = scmp.eq.s32.totalorder %s20, 1
      %p83 = por %p81, %p82
      %p85 = scmp.ne.s32.totalorder %s68, %s84
      %p86 = scmp.eq.s32.totalorder %s20, 0
      %p87 = por %p85, %p86
      %s88 = ssub.s32 %s21, %s33
      %s89 = ssub.s32 %s22, %s29
      %s90 = sor.u32 %s88, %s89
      %p91 = scmp.eq.s32.totalorder %s90, 0
      %s93 = sadd.s32 %s92, 1
      %s94 = scalar_select %p91, %s92, %s93
      %p97 = pneg %p91
      %p98 = scmp.eq.s32.totalorder %s14, 1
      %p99 = por %p97, %p98
      %p100 = scmp.ne.s32.totalorder %s92, %s95
      %p101 = scmp.eq.s32.totalorder %s14, 0
      %p102 = por %p100, %p101
      %p103 = scmp.ne.s32.totalorder %s92, %s95
      %p104 = scmp.eq.s32.totalorder %s19, 1
      %p105 = por %p103, %p104
      %p106 = scmp.ne.s32.totalorder %s95, %s96
      %p107 = scmp.eq.s32.totalorder %s19, 0
      %p108 = por %p106, %p107
      %p109 = scmp.ne.s32.totalorder %s95, %s96
      %p110 = scmp.eq.s32.totalorder %s20, 1
      %p111 = por %p109, %p110
      %p113 = scmp.ne.s32.totalorder %s96, %s112
      %p114 = scmp.eq.s32.totalorder %s20, 0
      %p115 = por %p113, %p114
      %p116 = scmp.le.s32.totalorder 1, %s14
      %p117 = scmp.lt.s32.totalorder %s14, 3
      %p118 = pnand %p116, %p117
      %p119 = pneg %p118
      // Predicated region
      $region9: #{tpu_custom_call.1} parent=5 // pred_check
        _
      $region10: #{tpu_custom_call.1} parent=5 // pred_check_branch
        %121 = sbr.rel (%p118) target = $region12
      $region11: #{tpu_custom_call.1} parent=5 // pred_region
        %s122 = ssub.s32 %s14, 1
        // Predicated region
        $region13: #{tpu_custom_call.1} parent=11 // pred_check
          %p123 = pneg %p80
        $region14: #{tpu_custom_call.1} parent=11 // pred_check_branch
          %125 = sbr.rel (%p123) target = $region16
        $region15: #{tpu_custom_call.1} parent=11 // pred_region
          %s126 = smul.u32 5, %s23
          %p127 = scmp.lt.s32.totalorder %s126, 4
          %s128 = scalar_select %p127, %s126, 4
          %s129 = smul.addr %s128, 8
          %s130 = scalar_lea.vmem %s1, %s129
          %s131 = smul.u32 5, %s23
        $region16: #{tpu_custom_call.1} parent=11 // pred_fallthru
          _
      $region12: #{tpu_custom_call.1} parent=5 // pred_fallthru
        _
      %p132 = scmp.lt.s32.totalorder %s14, 2
      // Predicated region
      $region17: #{tpu_custom_call.1} parent=5 // pred_check
        %p133 = pneg %p132
      $region18: #{tpu_custom_call.1} parent=5 // pred_check_branch
        %135 = sbr.rel (%p133) target = $region20
      $region19: #{tpu_custom_call.1} parent=5 // pred_region
        // Predicated region
        $region21: #{tpu_custom_call.1} parent=19 // pred_check
          %p136 = pneg %p48
        $region22: #{tpu_custom_call.1} parent=19 // pred_check_branch
          %138 = sbr.rel (%p136) target = $region24
        $region23: #{tpu_custom_call.1} parent=19 // pred_region
          %s139 = sand.u32 %s38, 1
          %s140 = scalar_lea.sflag [#allocation3], %s139
          %s141 = sand.u32 %s38, 1
          %s142 = smul.addr %s141, 1280
          %s143 = scalar_lea.vmem [#allocation2], %s142
          %s144 = smul.u32 5, %s21
          %s145 = smul.u32 32, %s22
          %s146 = ssub.s32 41, %s145
          %p147 = scmp.lt.s32.totalorder %s146, 32
          %s148 = scalar_select %p147, %s146, 32
          %s149 = smul.u32 40, %s148
          %s150 = ssub.s32 1280, %s149
          %s151 = sshll.u32 %s150, 4
          %152 = vsyncadd %s140, %s151
          %p153 = scmp.ne.s32.totalorder 0, %s149
          %s154 = smul.addr %s144, 41
          %s155 = sadd.s32 %s145, %s154
          %s156 = smul.addr %s155, 8
          %s157 = scalar_lea.hbm %s0, %s156
          %s158 = smul.u32 %s148, 8
          %s159 = smul.u32 %s158, 5
          %s160 = sshll.u32 %s157, 4
          %s161 = int_to_ptr.hbm [resolvable:$true] %s160
          %s162 = sshll.u32 %s143, 4
          %s163 = int_to_ptr.vmem [resolvable:$true] %s162
          %s164 = sshll.u32 %s159, 4
          %168 = dma.hbm_to_vmem [thread:$0]  (%p153), %s161, %s164, %s163, %s140, 5248, 4096, %s158
        $region24: #{tpu_custom_call.1} parent=19 // pred_fallthru
          _
      $region20: #{tpu_custom_call.1} parent=5 // pred_fallthru
        _
      %p169 = scmp.le.s32.totalorder 1, %s14
      %p170 = scmp.lt.s32.totalorder %s14, 3
      %p171 = pnand %p169, %p170
      %p172 = pneg %p171
      // Predicated region
      $region25: #{tpu_custom_call.1} parent=5 // pred_check
        _
      $region26: #{tpu_custom_call.1} parent=5 // pred_check_branch
        %174 = sbr.rel (%p171) target = $region28
      $region27: #{tpu_custom_call.1} parent=5 // pred_region
        %s175 = ssub.s32 %s14, 1
        %s176 = sand.u32 %s41, 1
        %s177 = scalar_lea.sflag [#allocation3], %s176
        %s178 = sand.u32 %s41, 1
        %s179 = smul.addr %s178, 1280
        %s180 = scalar_lea.vmem [#allocation2], %s179
        // Predicated region
        $region29: #{tpu_custom_call.1} parent=27 // pred_check
          %p181 = pneg %p54
        $region30: #{tpu_custom_call.1} parent=27 // pred_check_branch
          %183 = sbr.rel (%p181) target = $region32
        $region31: #{tpu_custom_call.1} parent=27 // pred_region
          %185 = dma.done %s177, 20480
        $region32: #{tpu_custom_call.1} parent=27 // pred_fallthru
          _
        %s186 = sand.u32 %s41, 1
        %s187 = scalar_lea.sflag [#allocation3], %s186
        %s188 = sand.u32 %s41, 1
        %s189 = smul.addr %s188, 1280
        %s190 = scalar_lea.vmem [#allocation2], %s189
        %p191 = pneg %p54
        %p192 = pneg %p51
        %s193 = smul.u32 5, %s23
        %p194 = scmp.lt.s32.totalorder %s193, 4
        %s195 = scalar_select %p194, %s193, 4
        %s196 = smul.addr %s195, 8
        %s197 = scalar_lea.vmem %s1, %s196
        %p198 = pneg %p80
        %p199 = pneg %p77
        %p200 = pneg %p108
        %p201 = pneg %p105
        %s202 = sand.u32 %s95, 1
        %s203 = scalar_lea.sflag [#allocation4], %s202
        %s204 = sand.u32 %s95, 1
        %s205 = smul.addr %s204, 1280
        %s206 = scalar_lea.vmem [#allocation5], %s205
        %s207 = smul.u32 5, %s23
        %s208 = smul.u32 32, %s24
        %s209 = ssub.s32 41, %s208
        %p210 = scmp.lt.s32.totalorder %s209, 32
        %s211 = scalar_select %p210, %s209, 32
        %s212 = smul.u32 40, %s211
        %s213 = smul.u32 5, %s23
        %p214 = scmp.lt.s32.totalorder %s213, 4
        %s215 = scalar_select %p214, %s213, 4
        %s216 = smul.addr %s215, 8
        %s217 = scalar_lea.vmem %s1, %s216
        %s218 = smul.u32 5, %s23
        %s219 = smul.u32 5, %s23
        %s220 = smul.u32 32, %s24
        %s221 = ssub.s32 41, %s220
        %p222 = scmp.lt.s32.totalorder %s221, 32
        %s223 = scalar_select %p222, %s221, 32
        %s224 = smul.u32 40, %s223
        %v225 = vld [vmem:[%s180] sm:$0xff]
        %v226 = vld [vmem:[%s180 + $0x8] sm:$0xff]
        %v227 = vld [vmem:[%s180 + $0x10] sm:$0xff]
        %v228 = vld [vmem:[%s180 + $0x18] sm:$0xff]
        %v229 = vld [vmem:[%s180 + $0x20] sm:$0xff]
        %v230 = vld [vmem:[%s180 + $0x28] sm:$0xff]
        %v231 = vld [vmem:[%s180 + $0x30] sm:$0xff]
        %v232 = vld [vmem:[%s180 + $0x38] sm:$0xff]
        %v233 = vld [vmem:[%s180 + $0x40] sm:$0xff]
        %v234 = vld [vmem:[%s180 + $0x48] sm:$0xff]
        %v235 = vld [vmem:[%s180 + $0x50] sm:$0xff]
        %v236 = vld [vmem:[%s180 + $0x58] sm:$0xff]
        %v237 = vld [vmem:[%s180 + $0x60] sm:$0xff]
        %v238 = vld [vmem:[%s180 + $0x68] sm:$0xff]
        %v239 = vld [vmem:[%s180 + $0x70] sm:$0xff]
        %v240 = vld [vmem:[%s180 + $0x78] sm:$0xff]
        %v241 = vld [vmem:[%s180 + $0x80] sm:$0xff]
        %v242 = vld [vmem:[%s180 + $0x88] sm:$0xff]
        %v243 = vld [vmem:[%s180 + $0x90] sm:$0xff]
        %v244 = vld [vmem:[%s180 + $0x98] sm:$0xff]
        %v245 = vld [vmem:[%s180 + $0xa0] sm:$0xff]
        %v246 = vld [vmem:[%s180 + $0xa8] sm:$0xff]
        %v247 = vld [vmem:[%s180 + $0xb0] sm:$0xff]
        %v248 = vld [vmem:[%s180 + $0xb8] sm:$0xff]
        %v249 = vld [vmem:[%s180 + $0xc0] sm:$0xff]
        %v250 = vld [vmem:[%s180 + $0xc8] sm:$0xff]
        %v251 = vld [vmem:[%s180 + $0xd0] sm:$0xff]
        %v252 = vld [vmem:[%s180 + $0xd8] sm:$0xff]
        %v253 = vld [vmem:[%s180 + $0xe0] sm:$0xff]
        %v254 = vld [vmem:[%s180 + $0xe8] sm:$0xff]
        %v255 = vld [vmem:[%s180 + $0xf0] sm:$0xff]
        %v256 = vld [vmem:[%s180 + $0xf8] sm:$0xff]
        %v257 = vld [vmem:[%s180 + $0x100] sm:$0xff]
        %v258 = vld [vmem:[%s180 + $0x108] sm:$0xff]
        %v259 = vld [vmem:[%s180 + $0x110] sm:$0xff]
        %v260 = vld [vmem:[%s180 + $0x118] sm:$0xff]
        %v261 = vld [vmem:[%s180 + $0x120] sm:$0xff]
        %v262 = vld [vmem:[%s180 + $0x128] sm:$0xff]
        %v263 = vld [vmem:[%s180 + $0x130] sm:$0xff]
        %v264 = vld [vmem:[%s180 + $0x138] sm:$0xff]
        %v265 = vld [vmem:[%s180 + $0x140] sm:$0xff]
        %v266 = vld [vmem:[%s180 + $0x148] sm:$0xff]
        %v267 = vld [vmem:[%s180 + $0x150] sm:$0xff]
        %v268 = vld [vmem:[%s180 + $0x158] sm:$0xff]
        %v269 = vld [vmem:[%s180 + $0x160] sm:$0xff]
        %v270 = vld [vmem:[%s180 + $0x168] sm:$0xff]
        %v271 = vld [vmem:[%s180 + $0x170] sm:$0xff]
        %v272 = vld [vmem:[%s180 + $0x178] sm:$0xff]
        %v273 = vld [vmem:[%s180 + $0x180] sm:$0xff]
        %v274 = vld [vmem:[%s180 + $0x188] sm:$0xff]
        %v275 = vld [vmem:[%s180 + $0x190] sm:$0xff]
        %v276 = vld [vmem:[%s180 + $0x198] sm:$0xff]
        %v277 = vld [vmem:[%s180 + $0x1a0] sm:$0xff]
        %v278 = vld [vmem:[%s180 + $0x1a8] sm:$0xff]
        %v279 = vld [vmem:[%s180 + $0x1b0] sm:$0xff]
        %v280 = vld [vmem:[%s180 + $0x1b8] sm:$0xff]
        %v281 = vld [vmem:[%s180 + $0x1c0] sm:$0xff]
        %v282 = vld [vmem:[%s180 + $0x1c8] sm:$0xff]
        %v283 = vld [vmem:[%s180 + $0x1d0] sm:$0xff]
        %v284 = vld [vmem:[%s180 + $0x1d8] sm:$0xff]
        %v285 = vld [vmem:[%s180 + $0x1e0] sm:$0xff]
        %v286 = vld [vmem:[%s180 + $0x1e8] sm:$0xff]
        %v287 = vld [vmem:[%s180 + $0x1f0] sm:$0xff]
        %v288 = vld [vmem:[%s180 + $0x1f8] sm:$0xff]
        %v289 = vld [vmem:[%s180 + $0x200] sm:$0xff]
        %v290 = vld [vmem:[%s180 + $0x208] sm:$0xff]
        %v291 = vld [vmem:[%s180 + $0x210] sm:$0xff]
        %v292 = vld [vmem:[%s180 + $0x218] sm:$0xff]
        %v293 = vld [vmem:[%s180 + $0x220] sm:$0xff]
        %v294 = vld [vmem:[%s180 + $0x228] sm:$0xff]
        %v295 = vld [vmem:[%s180 + $0x230] sm:$0xff]
        %v296 = vld [vmem:[%s180 + $0x238] sm:$0xff]
        %v297 = vld [vmem:[%s180 + $0x240] sm:$0xff]
        %v298 = vld [vmem:[%s180 + $0x248] sm:$0xff]
        %v299 = vld [vmem:[%s180 + $0x250] sm:$0xff]
        %v300 = vld [vmem:[%s180 + $0x258] sm:$0xff]
        %v301 = vld [vmem:[%s180 + $0x260] sm:$0xff]
        %v302 = vld [vmem:[%s180 + $0x268] sm:$0xff]
        %v303 = vld [vmem:[%s180 + $0x270] sm:$0xff]
        %v304 = vld [vmem:[%s180 + $0x278] sm:$0xff]
        %v305 = vld [vmem:[%s180 + $0x280] sm:$0xff]
        %v306 = vld [vmem:[%s180 + $0x288] sm:$0xff]
        %v307 = vld [vmem:[%s180 + $0x290] sm:$0xff]
        %v308 = vld [vmem:[%s180 + $0x298] sm:$0xff]
        %v309 = vld [vmem:[%s180 + $0x2a0] sm:$0xff]
        %v310 = vld [vmem:[%s180 + $0x2a8] sm:$0xff]
        %v311 = vld [vmem:[%s180 + $0x2b0] sm:$0xff]
        %v312 = vld [vmem:[%s180 + $0x2b8] sm:$0xff]
        %v313 = vld [vmem:[%s180 + $0x2c0] sm:$0xff]
        %v314 = vld [vmem:[%s180 + $0x2c8] sm:$0xff]
        %v315 = vld [vmem:[%s180 + $0x2d0] sm:$0xff]
        %v316 = vld [vmem:[%s180 + $0x2d8] sm:$0xff]
        %v317 = vld [vmem:[%s180 + $0x2e0] sm:$0xff]
        %v318 = vld [vmem:[%s180 + $0x2e8] sm:$0xff]
        %v319 = vld [vmem:[%s180 + $0x2f0] sm:$0xff]
        %v320 = vld [vmem:[%s180 + $0x2f8] sm:$0xff]
        %v321 = vld [vmem:[%s180 + $0x300] sm:$0xff]
        %v322 = vld [vmem:[%s180 + $0x308] sm:$0xff]
        %v323 = vld [vmem:[%s180 + $0x310] sm:$0xff]
        %v324 = vld [vmem:[%s180 + $0x318] sm:$0xff]
        %v325 = vld [vmem:[%s180 + $0x320] sm:$0xff]
        %v326 = vld [vmem:[%s180 + $0x328] sm:$0xff]
        %v327 = vld [vmem:[%s180 + $0x330] sm:$0xff]
        %v328 = vld [vmem:[%s180 + $0x338] sm:$0xff]
        %v329 = vld [vmem:[%s180 + $0x340] sm:$0xff]
        %v330 = vld [vmem:[%s180 + $0x348] sm:$0xff]
        %v331 = vld [vmem:[%s180 + $0x350] sm:$0xff]
        %v332 = vld [vmem:[%s180 + $0x358] sm:$0xff]
        %v333 = vld [vmem:[%s180 + $0x360] sm:$0xff]
        %v334 = vld [vmem:[%s180 + $0x368] sm:$0xff]
        %v335 = vld [vmem:[%s180 + $0x370] sm:$0xff]
        %v336 = vld [vmem:[%s180 + $0x378] sm:$0xff]
        %v337 = vld [vmem:[%s180 + $0x380] sm:$0xff]
        %v338 = vld [vmem:[%s180 + $0x388] sm:$0xff]
        %v339 = vld [vmem:[%s180 + $0x390] sm:$0xff]
        %v340 = vld [vmem:[%s180 + $0x398] sm:$0xff]
        %v341 = vld [vmem:[%s180 + $0x3a0] sm:$0xff]
        %v342 = vld [vmem:[%s180 + $0x3a8] sm:$0xff]
        %v343 = vld [vmem:[%s180 + $0x3b0] sm:$0xff]
        %v344 = vld [vmem:[%s180 + $0x3b8] sm:$0xff]
        %v345 = vld [vmem:[%s180 + $0x3c0] sm:$0xff]
        %v346 = vld [vmem:[%s180 + $0x3c8] sm:$0xff]
        %v347 = vld [vmem:[%s180 + $0x3d0] sm:$0xff]
        %v348 = vld [vmem:[%s180 + $0x3d8] sm:$0xff]
        %v349 = vld [vmem:[%s180 + $0x3e0] sm:$0xff]
        %v350 = vld [vmem:[%s180 + $0x3e8] sm:$0xff]
        %v351 = vld [vmem:[%s180 + $0x3f0] sm:$0xff]
        %v352 = vld [vmem:[%s180 + $0x3f8] sm:$0xff]
        %v353 = vld [vmem:[%s180 + $0x400] sm:$0xff]
        %v354 = vld [vmem:[%s180 + $0x408] sm:$0xff]
        %v355 = vld [vmem:[%s180 + $0x410] sm:$0xff]
        %v356 = vld [vmem:[%s180 + $0x418] sm:$0xff]
        %v357 = vld [vmem:[%s180 + $0x420] sm:$0xff]
        %v358 = vld [vmem:[%s180 + $0x428] sm:$0xff]
        %v359 = vld [vmem:[%s180 + $0x430] sm:$0xff]
        %v360 = vld [vmem:[%s180 + $0x438] sm:$0xff]
        %v361 = vld [vmem:[%s180 + $0x440] sm:$0xff]
        %v362 = vld [vmem:[%s180 + $0x448] sm:$0xff]
        %v363 = vld [vmem:[%s180 + $0x450] sm:$0xff]
        %v364 = vld [vmem:[%s180 + $0x458] sm:$0xff]
        %v365 = vld [vmem:[%s180 + $0x460] sm:$0xff]
        %v366 = vld [vmem:[%s180 + $0x468] sm:$0xff]
        %v367 = vld [vmem:[%s180 + $0x470] sm:$0xff]
        %v368 = vld [vmem:[%s180 + $0x478] sm:$0xff]
        %v369 = vld [vmem:[%s180 + $0x480] sm:$0xff]
        %v370 = vld [vmem:[%s180 + $0x488] sm:$0xff]
        %v371 = vld [vmem:[%s180 + $0x490] sm:$0xff]
        %v372 = vld [vmem:[%s180 + $0x498] sm:$0xff]
        %v373 = vld [vmem:[%s180 + $0x4a0] sm:$0xff]
        %v374 = vld [vmem:[%s180 + $0x4a8] sm:$0xff]
        %v375 = vld [vmem:[%s180 + $0x4b0] sm:$0xff]
        %v376 = vld [vmem:[%s180 + $0x4b8] sm:$0xff]
        %v377 = vld [vmem:[%s180 + $0x4c0] sm:$0xff]
        %v378 = vld [vmem:[%s180 + $0x4c8] sm:$0xff]
        %v379 = vld [vmem:[%s180 + $0x4d0] sm:$0xff]
        %v380 = vld [vmem:[%s180 + $0x4d8] sm:$0xff]
        %v381 = vld [vmem:[%s180 + $0x4e0] sm:$0xff]
        %v382 = vld [vmem:[%s180 + $0x4e8] sm:$0xff]
        %v383 = vld [vmem:[%s180 + $0x4f0] sm:$0xff]
        %v384 = vld [vmem:[%s180 + $0x4f8] sm:$0xff]
        %v385 = vld [vmem:[%s217] sm:$0xff]
        %v386 = vld [vmem:[%s217 + $0x8] sm:$0xff]
        %v387 = vld [vmem:[%s217 + $0x10] sm:$0xff]
        %v388 = vld [vmem:[%s217 + $0x18] sm:$0xff]
        %v389 = vld [vmem:[%s217 + $0x20] sm:$0xff]
        %391 = vset.pattern.permute.xlu0 0
        %392 = vperm.xlu0 %391, %v385
        %v393 = vpop.permute.xlu0 %392
        %396 = vset.pattern.permute.xlu0 0
        %397 = vperm.xlu0 %396, %v386
        %v398 = vpop.permute.xlu0 %397
        %401 = vset.pattern.permute.xlu0 0
        %402 = vperm.xlu0 %401, %v387
        %v403 = vpop.permute.xlu0 %402
        %406 = vset.pattern.permute.xlu0 0
        %407 = vperm.xlu0 %406, %v388
        %v408 = vpop.permute.xlu0 %407
        %411 = vset.pattern.permute.xlu0 0
        %412 = vperm.xlu0 %411, %v389
        %v413 = vpop.permute.xlu0 %412
        %v415 = vmul.f32 %v225, %v393
        %v416 = vmul.f32 %v226, %v393
        %v417 = vmul.f32 %v227, %v393
        %v418 = vmul.f32 %v228, %v393
        %v419 = vmul.f32 %v229, %v393
        %v420 = vmul.f32 %v230, %v393
        %v421 = vmul.f32 %v231, %v393
        %v422 = vmul.f32 %v232, %v393
        %v423 = vmul.f32 %v233, %v393
        %v424 = vmul.f32 %v234, %v393
        %v425 = vmul.f32 %v235, %v393
        %v426 = vmul.f32 %v236, %v393
        %v427 = vmul.f32 %v237, %v393
        %v428 = vmul.f32 %v238, %v393
        %v429 = vmul.f32 %v239, %v393
        %v430 = vmul.f32 %v240, %v393
        %v431 = vmul.f32 %v241, %v393
        %v432 = vmul.f32 %v242, %v393
        %v433 = vmul.f32 %v243, %v393
        %v434 = vmul.f32 %v244, %v393
        %v435 = vmul.f32 %v245, %v393
        %v436 = vmul.f32 %v246, %v393
        %v437 = vmul.f32 %v247, %v393
        %v438 = vmul.f32 %v248, %v393
        %v439 = vmul.f32 %v249, %v393
        %v440 = vmul.f32 %v250, %v393
        %v441 = vmul.f32 %v251, %v393
        %v442 = vmul.f32 %v252, %v393
        %v443 = vmul.f32 %v253, %v393
        %v444 = vmul.f32 %v254, %v393
        %v445 = vmul.f32 %v255, %v393
        %v446 = vmul.f32 %v256, %v393
        %v447 = vmul.f32 %v257, %v398
        %v448 = vmul.f32 %v258, %v398
        %v449 = vmul.f32 %v259, %v398
        %v450 = vmul.f32 %v260, %v398
        %v451 = vmul.f32 %v261, %v398
        %v452 = vmul.f32 %v262, %v398
        %v453 = vmul.f32 %v263, %v398
        %v454 = vmul.f32 %v264, %v398
        %v455 = vmul.f32 %v265, %v398
        %v456 = vmul.f32 %v266, %v398
        %v457 = vmul.f32 %v267, %v398
        %v458 = vmul.f32 %v268, %v398
        %v459 = vmul.f32 %v269, %v398
        %v460 = vmul.f32 %v270, %v398
        %v461 = vmul.f32 %v271, %v398
        %v462 = vmul.f32 %v272, %v398
        %v463 = vmul.f32 %v273, %v398
        %v464 = vmul.f32 %v274, %v398
        %v465 = vmul.f32 %v275, %v398
        %v466 = vmul.f32 %v276, %v398
        %v467 = vmul.f32 %v277, %v398
        %v468 = vmul.f32 %v278, %v398
        %v469 = vmul.f32 %v279, %v398
        %v470 = vmul.f32 %v280, %v398
        %v471 = vmul.f32 %v281, %v398
        %v472 = vmul.f32 %v282, %v398
        %v473 = vmul.f32 %v283, %v398
        %v474 = vmul.f32 %v284, %v398
        %v475 = vmul.f32 %v285, %v398
        %v476 = vmul.f32 %v286, %v398
        %v477 = vmul.f32 %v287, %v398
        %v478 = vmul.f32 %v288, %v398
        %v479 = vmul.f32 %v289, %v403
        %v480 = vmul.f32 %v290, %v403
        %v481 = vmul.f32 %v291, %v403
        %v482 = vmul.f32 %v292, %v403
        %v483 = vmul.f32 %v293, %v403
        %v484 = vmul.f32 %v294, %v403
        %v485 = vmul.f32 %v295, %v403
        %v486 = vmul.f32 %v296, %v403
        %v487 = vmul.f32 %v297, %v403
        %v488 = vmul.f32 %v298, %v403
        %v489 = vmul.f32 %v299, %v403
        %v490 = vmul.f32 %v300, %v403
        %v491 = vmul.f32 %v301, %v403
        %v492 = vmul.f32 %v302, %v403
        %v493 = vmul.f32 %v303, %v403
        %v494 = vmul.f32 %v304, %v403
        %v495 = vmul.f32 %v305, %v403
        %v496 = vmul.f32 %v306, %v403
        %v497 = vmul.f32 %v307, %v403
        %v498 = vmul.f32 %v308, %v403
        %v499 = vmul.f32 %v309, %v403
        %v500 = vmul.f32 %v310, %v403
        %v501 = vmul.f32 %v311, %v403
        %v502 = vmul.f32 %v312, %v403
        %v503 = vmul.f32 %v313, %v403
        %v504 = vmul.f32 %v314, %v403
        %v505 = vmul.f32 %v315, %v403
        %v506 = vmul.f32 %v316, %v403
        %v507 = vmul.f32 %v317, %v403
        %v508 = vmul.f32 %v318, %v403
        %v509 = vmul.f32 %v319, %v403
        %v510 = vmul.f32 %v320, %v403
        %v511 = vmul.f32 %v321, %v408
        %v512 = vmul.f32 %v322, %v408
        %v513 = vmul.f32 %v323, %v408
        %v514 = vmul.f32 %v324, %v408
        %v515 = vmul.f32 %v325, %v408
        %v516 = vmul.f32 %v326, %v408
        %v517 = vmul.f32 %v327, %v408
        %v518 = vmul.f32 %v328, %v408
        %v519 = vmul.f32 %v329, %v408
        %v520 = vmul.f32 %v330, %v408
        %v521 = vmul.f32 %v331, %v408
        %v522 = vmul.f32 %v332, %v408
        %v523 = vmul.f32 %v333, %v408
        %v524 = vmul.f32 %v334, %v408
        %v525 = vmul.f32 %v335, %v408
        %v526 = vmul.f32 %v336, %v408
        %v527 = vmul.f32 %v337, %v408
        %v528 = vmul.f32 %v338, %v408
        %v529 = vmul.f32 %v339, %v408
        %v530 = vmul.f32 %v340, %v408
        %v531 = vmul.f32 %v341, %v408
        %v532 = vmul.f32 %v342, %v408
        %v533 = vmul.f32 %v343, %v408
        %v534 = vmul.f32 %v344, %v408
        %v535 = vmul.f32 %v345, %v408
        %v536 = vmul.f32 %v346, %v408
        %v537 = vmul.f32 %v347, %v408
        %v538 = vmul.f32 %v348, %v408
        %v539 = vmul.f32 %v349, %v408
        %v540 = vmul.f32 %v350, %v408
        %v541 = vmul.f32 %v351, %v408
        %v542 = vmul.f32 %v352, %v408
        %v543 = vmul.f32 %v353, %v413
        %v544 = vmul.f32 %v354, %v413
        %v545 = vmul.f32 %v355, %v413
        %v546 = vmul.f32 %v356, %v413
        %v547 = vmul.f32 %v357, %v413
        %v548 = vmul.f32 %v358, %v413
        %v549 = vmul.f32 %v359, %v413
        %v550 = vmul.f32 %v360, %v413
        %v551 = vmul.f32 %v361, %v413
        %v552 = vmul.f32 %v362, %v413
        %v553 = vmul.f32 %v363, %v413
        %v554 = vmul.f32 %v364, %v413
        %v555 = vmul.f32 %v365, %v413
        %v556 = vmul.f32 %v366, %v413
        %v557 = vmul.f32 %v367, %v413
        %v558 = vmul.f32 %v368, %v413
        %v559 = vmul.f32 %v369, %v413
        %v560 = vmul.f32 %v370, %v413
        %v561 = vmul.f32 %v371, %v413
        %v562 = vmul.f32 %v372, %v413
        %v563 = vmul.f32 %v373, %v413
        %v564 = vmul.f32 %v374, %v413
        %v565 = vmul.f32 %v375, %v413
        %v566 = vmul.f32 %v376, %v413
        %v567 = vmul.f32 %v377, %v413
        %v568 = vmul.f32 %v378, %v413
        %v569 = vmul.f32 %v379, %v413
        %v570 = vmul.f32 %v380, %v413
        %v571 = vmul.f32 %v381, %v413
        %v572 = vmul.f32 %v382, %v413
        %v573 = vmul.f32 %v383, %v413
        %v574 = vmul.f32 %v384, %v413
        %575 = vst [vmem:[%s206] sm:$0xff] %v415
        %576 = vst [vmem:[%s206 + $0x8] sm:$0xff] %v416
        %577 = vst [vmem:[%s206 + $0x10] sm:$0xff] %v417
        %578 = vst [vmem:[%s206 + $0x18] sm:$0xff] %v418
        %579 = vst [vmem:[%s206 + $0x20] sm:$0xff] %v419
        %580 = vst [vmem:[%s206 + $0x28] sm:$0xff] %v420
        %581 = vst [vmem:[%s206 + $0x30] sm:$0xff] %v421
        %582 = vst [vmem:[%s206 + $0x38] sm:$0xff] %v422
        %583 = vst [vmem:[%s206 + $0x40] sm:$0xff] %v423
        %584 = vst [vmem:[%s206 + $0x48] sm:$0xff] %v424
        %585 = vst [vmem:[%s206 + $0x50] sm:$0xff] %v425
        %586 = vst [vmem:[%s206 + $0x58] sm:$0xff] %v426
        %587 = vst [vmem:[%s206 + $0x60] sm:$0xff] %v427
        %588 = vst [vmem:[%s206 + $0x68] sm:$0xff] %v428
        %589 = vst [vmem:[%s206 + $0x70] sm:$0xff] %v429
        %590 = vst [vmem:[%s206 + $0x78] sm:$0xff] %v430
        %591 = vst [vmem:[%s206 + $0x80] sm:$0xff] %v431
        %592 = vst [vmem:[%s206 + $0x88] sm:$0xff] %v432
        %593 = vst [vmem:[%s206 + $0x90] sm:$0xff] %v433
        %594 = vst [vmem:[%s206 + $0x98] sm:$0xff] %v434
        %595 = vst [vmem:[%s206 + $0xa0] sm:$0xff] %v435
        %596 = vst [vmem:[%s206 + $0xa8] sm:$0xff] %v436
        %597 = vst [vmem:[%s206 + $0xb0] sm:$0xff] %v437
        %598 = vst [vmem:[%s206 + $0xb8] sm:$0xff] %v438
        %599 = vst [vmem:[%s206 + $0xc0] sm:$0xff] %v439
        %600 = vst [vmem:[%s206 + $0xc8] sm:$0xff] %v440
        %601 = vst [vmem:[%s206 + $0xd0] sm:$0xff] %v441
        %602 = vst [vmem:[%s206 + $0xd8] sm:$0xff] %v442
        %603 = vst [vmem:[%s206 + $0xe0] sm:$0xff] %v443
        %604 = vst [vmem:[%s206 + $0xe8] sm:$0xff] %v444
        %605 = vst [vmem:[%s206 + $0xf0] sm:$0xff] %v445
        %606 = vst [vmem:[%s206 + $0xf8] sm:$0xff] %v446
        %607 = vst [vmem:[%s206 + $0x100] sm:$0xff] %v447
        %608 = vst [vmem:[%s206 + $0x108] sm:$0xff] %v448
        %609 = vst [vmem:[%s206 + $0x110] sm:$0xff] %v449
        %610 = vst [vmem:[%s206 + $0x118] sm:$0xff] %v450
        %611 = vst [vmem:[%s206 + $0x120] sm:$0xff] %v451
        %612 = vst [vmem:[%s206 + $0x128] sm:$0xff] %v452
        %613 = vst [vmem:[%s206 + $0x130] sm:$0xff] %v453
        %614 = vst [vmem:[%s206 + $0x138] sm:$0xff] %v454
        %615 = vst [vmem:[%s206 + $0x140] sm:$0xff] %v455
        %616 = vst [vmem:[%s206 + $0x148] sm:$0xff] %v456
        %617 = vst [vmem:[%s206 + $0x150] sm:$0xff] %v457
        %618 = vst [vmem:[%s206 + $0x158] sm:$0xff] %v458
        %619 = vst [vmem:[%s206 + $0x160] sm:$0xff] %v459
        %620 = vst [vmem:[%s206 + $0x168] sm:$0xff] %v460
        %621 = vst [vmem:[%s206 + $0x170] sm:$0xff] %v461
        %622 = vst [vmem:[%s206 + $0x178] sm:$0xff] %v462
        %623 = vst [vmem:[%s206 + $0x180] sm:$0xff] %v463
        %624 = vst [vmem:[%s206 + $0x188] sm:$0xff] %v464
        %625 = vst [vmem:[%s206 + $0x190] sm:$0xff] %v465
        %626 = vst [vmem:[%s206 + $0x198] sm:$0xff] %v466
        %627 = vst [vmem:[%s206 + $0x1a0] sm:$0xff] %v467
        %628 = vst [vmem:[%s206 + $0x1a8] sm:$0xff] %v468
        %629 = vst [vmem:[%s206 + $0x1b0] sm:$0xff] %v469
        %630 = vst [vmem:[%s206 + $0x1b8] sm:$0xff] %v470
        %631 = vst [vmem:[%s206 + $0x1c0] sm:$0xff] %v471
        %632 = vst [vmem:[%s206 + $0x1c8] sm:$0xff] %v472
        %633 = vst [vmem:[%s206 + $0x1d0] sm:$0xff] %v473
        %634 = vst [vmem:[%s206 + $0x1d8] sm:$0xff] %v474
        %635 = vst [vmem:[%s206 + $0x1e0] sm:$0xff] %v475
        %636 = vst [vmem:[%s206 + $0x1e8] sm:$0xff] %v476
        %637 = vst [vmem:[%s206 + $0x1f0] sm:$0xff] %v477
        %638 = vst [vmem:[%s206 + $0x1f8] sm:$0xff] %v478
        %639 = vst [vmem:[%s206 + $0x200] sm:$0xff] %v479
        %640 = vst [vmem:[%s206 + $0x208] sm:$0xff] %v480
        %641 = vst [vmem:[%s206 + $0x210] sm:$0xff] %v481
        %642 = vst [vmem:[%s206 + $0x218] sm:$0xff] %v482
        %643 = vst [vmem:[%s206 + $0x220] sm:$0xff] %v483
        %644 = vst [vmem:[%s206 + $0x228] sm:$0xff] %v484
        %645 = vst [vmem:[%s206 + $0x230] sm:$0xff] %v485
        %646 = vst [vmem:[%s206 + $0x238] sm:$0xff] %v486
        %647 = vst [vmem:[%s206 + $0x240] sm:$0xff] %v487
        %648 = vst [vmem:[%s206 + $0x248] sm:$0xff] %v488
        %649 = vst [vmem:[%s206 + $0x250] sm:$0xff] %v489
        %650 = vst [vmem:[%s206 + $0x258] sm:$0xff] %v490
        %651 = vst [vmem:[%s206 + $0x260] sm:$0xff] %v491
        %652 = vst [vmem:[%s206 + $0x268] sm:$0xff] %v492
        %653 = vst [vmem:[%s206 + $0x270] sm:$0xff] %v493
        %654 = vst [vmem:[%s206 + $0x278] sm:$0xff] %v494
        %655 = vst [vmem:[%s206 + $0x280] sm:$0xff] %v495
        %656 = vst [vmem:[%s206 + $0x288] sm:$0xff] %v496
        %657 = vst [vmem:[%s206 + $0x290] sm:$0xff] %v497
        %658 = vst [vmem:[%s206 + $0x298] sm:$0xff] %v498
        %659 = vst [vmem:[%s206 + $0x2a0] sm:$0xff] %v499
        %660 = vst [vmem:[%s206 + $0x2a8] sm:$0xff] %v500
        %661 = vst [vmem:[%s206 + $0x2b0] sm:$0xff] %v501
        %662 = vst [vmem:[%s206 + $0x2b8] sm:$0xff] %v502
        %663 = vst [vmem:[%s206 + $0x2c0] sm:$0xff] %v503
        %664 = vst [vmem:[%s206 + $0x2c8] sm:$0xff] %v504
        %665 = vst [vmem:[%s206 + $0x2d0] sm:$0xff] %v505
        %666 = vst [vmem:[%s206 + $0x2d8] sm:$0xff] %v506
        %667 = vst [vmem:[%s206 + $0x2e0] sm:$0xff] %v507
        %668 = vst [vmem:[%s206 + $0x2e8] sm:$0xff] %v508
        %669 = vst [vmem:[%s206 + $0x2f0] sm:$0xff] %v509
        %670 = vst [vmem:[%s206 + $0x2f8] sm:$0xff] %v510
        %671 = vst [vmem:[%s206 + $0x300] sm:$0xff] %v511
        %672 = vst [vmem:[%s206 + $0x308] sm:$0xff] %v512
        %673 = vst [vmem:[%s206 + $0x310] sm:$0xff] %v513
        %674 = vst [vmem:[%s206 + $0x318] sm:$0xff] %v514
        %675 = vst [vmem:[%s206 + $0x320] sm:$0xff] %v515
        %676 = vst [vmem:[%s206 + $0x328] sm:$0xff] %v516
        %677 = vst [vmem:[%s206 + $0x330] sm:$0xff] %v517
        %678 = vst [vmem:[%s206 + $0x338] sm:$0xff] %v518
        %679 = vst [vmem:[%s206 + $0x340] sm:$0xff] %v519
        %680 = vst [vmem:[%s206 + $0x348] sm:$0xff] %v520
        %681 = vst [vmem:[%s206 + $0x350] sm:$0xff] %v521
        %682 = vst [vmem:[%s206 + $0x358] sm:$0xff] %v522
        %683 = vst [vmem:[%s206 + $0x360] sm:$0xff] %v523
        %684 = vst [vmem:[%s206 + $0x368] sm:$0xff] %v524
        %685 = vst [vmem:[%s206 + $0x370] sm:$0xff] %v525
        %686 = vst [vmem:[%s206 + $0x378] sm:$0xff] %v526
        %687 = vst [vmem:[%s206 + $0x380] sm:$0xff] %v527
        %688 = vst [vmem:[%s206 + $0x388] sm:$0xff] %v528
        %689 = vst [vmem:[%s206 + $0x390] sm:$0xff] %v529
        %690 = vst [vmem:[%s206 + $0x398] sm:$0xff] %v530
        %691 = vst [vmem:[%s206 + $0x3a0] sm:$0xff] %v531
        %692 = vst [vmem:[%s206 + $0x3a8] sm:$0xff] %v532
        %693 = vst [vmem:[%s206 + $0x3b0] sm:$0xff] %v533
        %694 = vst [vmem:[%s206 + $0x3b8] sm:$0xff] %v534
        %695 = vst [vmem:[%s206 + $0x3c0] sm:$0xff] %v535
        %696 = vst [vmem:[%s206 + $0x3c8] sm:$0xff] %v536
        %697 = vst [vmem:[%s206 + $0x3d0] sm:$0xff] %v537
        %698 = vst [vmem:[%s206 + $0x3d8] sm:$0xff] %v538
        %699 = vst [vmem:[%s206 + $0x3e0] sm:$0xff] %v539
        %700 = vst [vmem:[%s206 + $0x3e8] sm:$0xff] %v540
        %701 = vst [vmem:[%s206 + $0x3f0] sm:$0xff] %v541
        %702 = vst [vmem:[%s206 + $0x3f8] sm:$0xff] %v542
        %703 = vst [vmem:[%s206 + $0x400] sm:$0xff] %v543
        %704 = vst [vmem:[%s206 + $0x408] sm:$0xff] %v544
        %705 = vst [vmem:[%s206 + $0x410] sm:$0xff] %v545
        %706 = vst [vmem:[%s206 + $0x418] sm:$0xff] %v546
        %707 = vst [vmem:[%s206 + $0x420] sm:$0xff] %v547
        %708 = vst [vmem:[%s206 + $0x428] sm:$0xff] %v548
        %709 = vst [vmem:[%s206 + $0x430] sm:$0xff] %v549
        %710 = vst [vmem:[%s206 + $0x438] sm:$0xff] %v550
        %711 = vst [vmem:[%s206 + $0x440] sm:$0xff] %v551
        %712 = vst [vmem:[%s206 + $0x448] sm:$0xff] %v552
        %713 = vst [vmem:[%s206 + $0x450] sm:$0xff] %v553
        %714 = vst [vmem:[%s206 + $0x458] sm:$0xff] %v554
        %715 = vst [vmem:[%s206 + $0x460] sm:$0xff] %v555
        %716 = vst [vmem:[%s206 + $0x468] sm:$0xff] %v556
        %717 = vst [vmem:[%s206 + $0x470] sm:$0xff] %v557
        %718 = vst [vmem:[%s206 + $0x478] sm:$0xff] %v558
        %719 = vst [vmem:[%s206 + $0x480] sm:$0xff] %v559
        %720 = vst [vmem:[%s206 + $0x488] sm:$0xff] %v560
        %721 = vst [vmem:[%s206 + $0x490] sm:$0xff] %v561
        %722 = vst [vmem:[%s206 + $0x498] sm:$0xff] %v562
        %723 = vst [vmem:[%s206 + $0x4a0] sm:$0xff] %v563
        %724 = vst [vmem:[%s206 + $0x4a8] sm:$0xff] %v564
        %725 = vst [vmem:[%s206 + $0x4b0] sm:$0xff] %v565
        %726 = vst [vmem:[%s206 + $0x4b8] sm:$0xff] %v566
        %727 = vst [vmem:[%s206 + $0x4c0] sm:$0xff] %v567
        %728 = vst [vmem:[%s206 + $0x4c8] sm:$0xff] %v568
        %729 = vst [vmem:[%s206 + $0x4d0] sm:$0xff] %v569
        %730 = vst [vmem:[%s206 + $0x4d8] sm:$0xff] %v570
        %731 = vst [vmem:[%s206 + $0x4e0] sm:$0xff] %v571
        %732 = vst [vmem:[%s206 + $0x4e8] sm:$0xff] %v572
        %733 = vst [vmem:[%s206 + $0x4f0] sm:$0xff] %v573
        %734 = vst [vmem:[%s206 + $0x4f8] sm:$0xff] %v574
        %s735 = sand.u32 %s95, 1
        %s736 = scalar_lea.sflag [#allocation4], %s735
        %s737 = sand.u32 %s95, 1
        %s738 = smul.addr %s737, 1280
        %s739 = scalar_lea.vmem [#allocation5], %s738
        // Predicated region
        $region33: #{tpu_custom_call.1} parent=27 // pred_check
          %p740 = pneg %p105
        $region34: #{tpu_custom_call.1} parent=27 // pred_check_branch
          %742 = sbr.rel (%p740) target = $region36
        $region35: #{tpu_custom_call.1} parent=27 // pred_region
          %s743 = smul.u32 5, %s23
          %s744 = smul.u32 32, %s24
          %s745 = ssub.s32 41, %s744
          %p746 = scmp.lt.s32.totalorder %s745, 32
          %s747 = scalar_select %p746, %s745, 32
          %s748 = smul.u32 40, %s747
          %s749 = ssub.s32 1280, %s748
          %s750 = sshll.u32 %s749, 4
          %751 = vsyncadd %s736, %s750
          %p752 = scmp.ne.s32.totalorder 0, %s748
          %s753 = smul.addr %s743, 41
          %s754 = sadd.s32 %s744, %s753
          %s755 = smul.addr %s754, 8
          %s756 = scalar_lea.hbm %s2, %s755
          %s757 = smul.u32 %s747, 8
          %s758 = smul.u32 %s757, 5
          %s759 = sshll.u32 %s739, 4
          %s760 = int_to_ptr.vmem [resolvable:$true] %s759
          %s761 = sshll.u32 %s756, 4
          %s762 = int_to_ptr.hbm [resolvable:$true] %s761
          %s763 = sshll.u32 %s758, 4
          %767 = dma.vmem_to_hbm [thread:$0]  (%p752), %s760, %s763, %s762, %s736, 4096, 5248, %s757
        $region36: #{tpu_custom_call.1} parent=27 // pred_fallthru
          _
      $region28: #{tpu_custom_call.1} parent=5 // pred_fallthru
        _
      %p768 = scmp.le.s32.totalorder 2, %s14
      // Predicated region
      $region37: #{tpu_custom_call.1} parent=5 // pred_check
        %p769 = pneg %p768
      $region38: #{tpu_custom_call.1} parent=5 // pred_check_branch
        %771 = sbr.rel (%p769) target = $region40
      $region39: #{tpu_custom_call.1} parent=5 // pred_region
        %s772 = ssub.s32 %s14, 2
        // Predicated region
        $region41: #{tpu_custom_call.1} parent=39 // pred_check
          %p773 = pneg %p111
        $region42: #{tpu_custom_call.1} parent=39 // pred_check_branch
          %775 = sbr.rel (%p773) target = $region44
        $region43: #{tpu_custom_call.1} parent=39 // pred_region
          %s776 = sand.u32 %s96, 1
          %s777 = scalar_lea.sflag [#allocation4], %s776
          %s778 = sand.u32 %s96, 1
          %s779 = smul.addr %s778, 1280
          %s780 = scalar_lea.vmem [#allocation5], %s779
          %782 = dma.done %s777, 20480
        $region44: #{tpu_custom_call.1} parent=39 // pred_fallthru
          _
      $region40: #{tpu_custom_call.1} parent=5 // pred_fallthru
        _
    $region6: #{tpu_custom_call.1} parent=1 // loop_footer
      %s18 = sadd.s32 1, %s14
    $region7: #{tpu_custom_call.1} parent=1 // loop_footer_branch
      %13 = sbr.rel target = $region3
    $region8: #{tpu_custom_call.1} parent=1 // loop_exit
      _
    %783 = vsyncpa [#allocation3], 1
    %s784 = scalar_lea.sflag [#allocation3], 1
    %785 = vsyncpa %s784, 1
    %786 = vsyncpa [#allocation4], 1
    %s787 = scalar_lea.sflag [#allocation4], 1
    %788 = vsyncpa %s787, 1

</llo_original>
